<compile_context>
chip_gen: v7x
topology: tpu7x:2x2x1
jax: 0.10.0
libtpu: 0.0.40
codegen_flags: <defaults>
</compile_context>

<pallas_src>
import functools
import math

import jax
import jax.numpy as jnp
from jax.experimental import pallas as pl
from jax.experimental.pallas import tpu as pltpu

_MIB = 1024 * 1024
_VMEM_LIMIT_BYTES = 32 * _MIB      # explicit: v5e default scoped VMEM is 16 MiB
_X_TILE_BUDGET_BYTES = 4 * _MIB    # target bytes for one (double-buffered) x tile


# ---------------------------------------------------------------------------
# Phase 1: per-(meta-path, row-tile) attention-score partial sums.
# ---------------------------------------------------------------------------
def _scores_kernel(x_ref, w_ref, b_ref, q_ref, part_ref, *, n_rows, block_n, nt):
    p = pl.program_id(0)
    t = pl.program_id(1)
    # MXU matmul in the input's native dtype, f32 accumulation.
    h = jnp.dot(x_ref[...], w_ref[...], preferred_element_type=jnp.float32)
    h_prime = jnp.tanh(h + b_ref[...].astype(jnp.float32))        # (block_n, Fout)
    if n_rows % block_n != 0:
        # Last row tile of each group is partially out of bounds: mask it so
        # padded (garbage) rows contribute 0 to the score sum.
        rows_left = n_rows - t * block_n
        row_idx = jax.lax.broadcasted_iota(jnp.int32, h_prime.shape, 0)
        h_prime = jnp.where(row_idx < rows_left, h_prime, 0.0)
    # sum_n sum_f h'[n, f] * q[f]  ==  sum_f q[f] * colsum(h')[f]
    colsum = jnp.sum(h_prime, axis=0, keepdims=True)               # (1, Fout)
    part_ref[p * nt + t] = jnp.sum(colsum * q_ref[...].astype(jnp.float32))


# ---------------------------------------------------------------------------
# Phase 3: out[0, :] = sum_p attn[p] * x[p, :]   (P fully unrolled, lane-dense)
# ---------------------------------------------------------------------------
def _weighted_sum_kernel(attn_ref, x_ref, out_ref):
    num_p = x_ref.shape[0]
    acc = x_ref[0:1, :].astype(jnp.float32) * attn_ref[0]
    for p in range(1, num_p):          # static unroll over meta-paths
        acc = acc + x_ref[p:p + 1, :].astype(jnp.float32) * attn_ref[p]
    out_ref[...] = acc.astype(out_ref.dtype)


# ---------------------------------------------------------------------------
# Tile-size helpers: byte-budget driven, respecting the (8, 128) constraint.
# ---------------------------------------------------------------------------
def _choose_block_rows(n, row_bytes, budget_bytes):
    rows = max(budget_bytes // max(row_bytes, 1), 8)
    rows = max((rows // 8) * 8, 8)
    return n if rows >= n else rows          # full dim is always a legal block


def _choose_block_lanes(m, per_lane_bytes, budget_bytes):
    lanes = max(budget_bytes // max(per_lane_bytes, 1), 128)
    lanes = max((lanes // 128) * 128, 128)
    return m if lanes >= m else lanes        # full dim is always a legal block


def semantic_attention_pallas(inputs, W, b, q, P):
    PN, Fin = inputs.shape
    assert PN % P == 0, "inputs rows must be P * N"
    N = PN // P
    Fout = W.shape[1]
    in_bytes = jnp.dtype(inputs.dtype).itemsize

    # ------------------ phase 1: score partial sums -------------------------
    block_n = _choose_block_rows(N, Fin * in_bytes, _X_TILE_BUDGET_BYTES)
    nt = pl.cdiv(N, block_n)
    x3 = inputs.reshape(P, N, Fin)

    score_cost = pl.CostEstimate(
        flops=2 * P * N * Fin * Fout + 3 * P * N * Fout,
        transcendentals=P * N * Fout,
        bytes_accessed=P * N * Fin * in_bytes + (Fin + 2) * Fout * 4 + P * nt * 4,
    )
    scores_partial = pl.pallas_call(
        functools.partial(_scores_kernel, n_rows=N, block_n=block_n, nt=nt),
        grid=(P, nt),
        in_specs=[
            pl.BlockSpec((None, block_n, Fin), lambda p, t: (p, t, 0)),
            pl.BlockSpec((Fin, Fout), lambda p, t: (0, 0)),
            pl.BlockSpec((1, Fout), lambda p, t: (0, 0)),
            pl.BlockSpec((1, Fout), lambda p, t: (0, 0)),
        ],
        # Flat 1-D SMEM output (no 8x128 SMEM padding).  It is not blocked
        # along p, so both grid axes stay "arbitrary" (parallel-marking an
        # unblocked output would be unsafe on v7x).
        out_specs=pl.BlockSpec(memory_space=pltpu.MemorySpace.SMEM),
        out_shape=jax.ShapeDtypeStruct((P * nt,), jnp.float32),
        compiler_params=pltpu.CompilerParams(
            dimension_semantics=("arbitrary", "arbitrary"),
            vmem_limit_bytes=_VMEM_LIMIT_BYTES),
        cost_estimate=score_cost,
    )(x3, W, b, q)

    # ------------------ phase 2: mean over N + softmax over P (P scalars) ---
    means = jnp.sum(scores_partial.reshape(P, nt), axis=1) / N
    attn = jax.nn.softmax(means, axis=0).astype(jnp.float32)       # (P,)

    # ------------------ phase 3: lane-dense attention-weighted sum ----------
    M = N * Fin
    x2 = inputs.reshape(P, M)                                      # free reshape
    block_m = _choose_block_lanes(M, P * in_bytes, _X_TILE_BUDGET_BYTES)
    mt = pl.cdiv(M, block_m)

    ws_cost = pl.CostEstimate(
        flops=2 * P * M,
        transcendentals=0,
        bytes_accessed=P * M * in_bytes + M * in_bytes + P * 4,
    )
    out_flat = pl.pallas_call(
        _weighted_sum_kernel,
        grid=(mt,),
        in_specs=[
            pl.BlockSpec(memory_space=pltpu.MemorySpace.SMEM),     # attn (P,)
            pl.BlockSpec((P, block_m), lambda t: (0, t)),
        ],
        out_specs=pl.BlockSpec((1, block_m), lambda t: (0, t)),
        out_shape=jax.ShapeDtypeStruct((1, M), inputs.dtype),
        compiler_params=pltpu.CompilerParams(
            dimension_semantics=("parallel",),
            vmem_limit_bytes=_VMEM_LIMIT_BYTES),
        cost_estimate=ws_cost,
    )(attn, x2)
    return out_flat.reshape(N, Fin)


def semantic_attention_ref(inputs, W, b, q, P):
    # pure-JAX reference matching the PyTorch forward
    h = inputs @ W
    h_prime = jnp.tanh(h + b)
    sa = (h_prime @ q.T).reshape(P, -1)
    sa = jnp.mean(sa, axis=1, keepdims=True)
    sa = jax.nn.softmax(sa, axis=0).reshape(P, 1, 1)
    x3 = inputs.reshape(P, -1, inputs.shape[1])
    return jnp.sum(x3 * sa, axis=0)


def _xavier_uniform(key, shape, gain=1.414):
    fan_out, fan_in = shape[0], shape[1]
    bound = gain * math.sqrt(6.0 / (fan_in + fan_out))
    return jax.random.uniform(key, shape, jnp.float32, -bound, bound)


if __name__ == "__main__":
    # small shapes: P meta-paths, N nodes per meta-path
    P = 4
    N = 8
    in_features = 32
    out_features = 16

    key = jax.random.PRNGKey(0)
    k_x, k_w, k_b, k_q = jax.random.split(key, 4)

    inputs = jax.random.normal(k_x, (P * N, in_features), jnp.float32)
    W = _xavier_uniform(k_w, (in_features, out_features))
    b = _xavier_uniform(k_b, (1, out_features))
    q = _xavier_uniform(k_q, (1, out_features))

    out = semantic_attention_pallas(inputs, W, b, q, P)
    out = jax.block_until_ready(out)

    ref = semantic_attention_ref(inputs, W, b, q, P)
    assert out.shape == (N, in_features)
    assert jnp.allclose(out, ref, atol=1e-4, rtol=1e-4)

    print("KERNEL_OK")
</pallas_src>

<mosaic_0001>
module attributes {stable_mosaic.version = 11 : i64} {
  func.func @_scores_kernel(%arg0: i32, %arg1: i32, %arg2: memref<1x8x32xf32, #tpu.memory_space<vmem>>, %arg3: memref<32x16xf32, #tpu.memory_space<vmem>>, %arg4: memref<1x16xf32, #tpu.memory_space<vmem>>, %arg5: memref<1x16xf32, #tpu.memory_space<vmem>>, %arg6: memref<4xf32, #tpu.memory_space<smem>>) attributes {dimension_semantics = [#tpu.dimension_semantics<arbitrary>, #tpu.dimension_semantics<arbitrary>], iteration_bounds = array<i64: 4, 1>, scalar_prefetch = 0 : i64, scratch_operands = 0 : i64, tpu.core_type = #tpu.core_type<tc>, window_params = [{transform_indices = @transform_0, window_bounds = array<i64: 1, 8, 32>}, {pipeline_mode = #tpu.pipeline_mode<synchronous>, transform_indices = @transform_1, window_bounds = array<i64: 32, 16>}, {pipeline_mode = #tpu.pipeline_mode<synchronous>, transform_indices = @transform_2, window_bounds = array<i64: 1, 16>}, {pipeline_mode = #tpu.pipeline_mode<synchronous>, transform_indices = @transform_3, window_bounds = array<i64: 1, 16>}, {transform_indices = @transform_4, window_bounds = array<i64: 4>}]} {
    %c0 = arith.constant 0 : index
    %c0_0 = arith.constant 0 : index
    %c0_1 = arith.constant 0 : index
    %0 = vector.load %arg2[%c0, %c0_0, %c0_1] : memref<1x8x32xf32, #tpu.memory_space<vmem>>, vector<1x8x32xf32>
    %1 = vector.shape_cast %0 : vector<1x8x32xf32> to vector<8x32xf32>
    %c0_2 = arith.constant 0 : index
    %c0_3 = arith.constant 0 : index
    %2 = vector.load %arg3[%c0_2, %c0_3] : memref<32x16xf32, #tpu.memory_space<vmem>>, vector<32x16xf32>
    %cst = arith.constant dense<0.000000e+00> : vector<8x16xf32>
    %3 = tpu.matmul %1, %2, %cst {dimension_numbers = #tpu.dot_dimension_numbers<[1], [0], [0], [1], [0, 0, 1, 1], [], []>} : vector<8x32xf32>, vector<32x16xf32>, vector<8x16xf32> -> vector<8x16xf32>
    %c0_4 = arith.constant 0 : index
    %c0_5 = arith.constant 0 : index
    %4 = vector.load %arg4[%c0_4, %c0_5] : memref<1x16xf32, #tpu.memory_space<vmem>>, vector<1x16xf32>
    %5 = vector.broadcast %4 : vector<1x16xf32> to vector<8x16xf32>
    %6 = arith.addf %3, %5 : vector<8x16xf32>
    %7 = math.tanh %6 : vector<8x16xf32>
    %cst_6 = arith.constant dense<0.000000e+00> : vector<16xf32>
    %8 = vector.multi_reduction <add>, %7, %cst_6 [0] : vector<8x16xf32> to vector<16xf32>
    %9 = vector.shape_cast %8 : vector<16xf32> to vector<1x16xf32>
    %c0_7 = arith.constant 0 : index
    %c0_8 = arith.constant 0 : index
    %10 = vector.load %arg5[%c0_7, %c0_8] : memref<1x16xf32, #tpu.memory_space<vmem>>, vector<1x16xf32>
    %11 = arith.mulf %9, %10 : vector<1x16xf32>
    %12 = vector.shape_cast %11 : vector<1x16xf32> to vector<1x1x16xf32>
    %cst_9 = arith.constant dense<0.000000e+00> : vector<1xf32>
    %13 = vector.multi_reduction <add>, %12, %cst_9 [1, 2] : vector<1x1x16xf32> to vector<1xf32>
    %14 = vector.shape_cast %13 : vector<1xf32> to vector<1x1x1xf32>
    %15 = vector.extract %14[0, 0, 0] : f32 from vector<1x1x1xf32>
    %c1_i32 = arith.constant 1 : i32
    %16 = arith.muli %arg0, %c1_i32 : i32
    %17 = arith.addi %16, %arg1 : i32
    %18 = arith.index_cast %17 : i32 to index
    %19 = memref.load %arg6[%18] : memref<4xf32, #tpu.memory_space<smem>>
    memref.store %15, %arg6[%18] : memref<4xf32, #tpu.memory_space<smem>>
    return
  }
  func.func @transform_0(%arg0: i32, %arg1: i32) -> (i32, i32, i32) {
    %c0_i32 = arith.constant 0 : i32
    %c0_i32_0 = arith.constant 0 : i32
    return %arg0, %arg1, %c0_i32 : i32, i32, i32
  }
  func.func @transform_1(%arg0: i32, %arg1: i32) -> (i32, i32) {
    %c0_i32 = arith.constant 0 : i32
    %c0_i32_0 = arith.constant 0 : i32
    %c0_i32_1 = arith.constant 0 : i32
    return %c0_i32, %c0_i32_0 : i32, i32
  }
  func.func @transform_2(%arg0: i32, %arg1: i32) -> (i32, i32) {
    %c0_i32 = arith.constant 0 : i32
    %c0_i32_0 = arith.constant 0 : i32
    %c0_i32_1 = arith.constant 0 : i32
    return %c0_i32, %c0_i32_0 : i32, i32
  }
  func.func @transform_3(%arg0: i32, %arg1: i32) -> (i32, i32) {
    %c0_i32 = arith.constant 0 : i32
    %c0_i32_0 = arith.constant 0 : i32
    %c0_i32_1 = arith.constant 0 : i32
    return %c0_i32, %c0_i32_0 : i32, i32
  }
  func.func @transform_4(%arg0: i32, %arg1: i32) -> i32 {
    %c0_i32 = arith.constant 0 : i32
    %c0_i32_0 = arith.constant 0 : i32
    return %c0_i32 : i32
  }
}

</mosaic_0001>

<llo_original>
// kernel: tpu_custom_call.1
$region0: #{tpu_custom_call.1}
  #allocation0 [shape = 'u32[]', space=smem, size = 0x4, offset = 0x4, fixed_abs, tag = 'smem constant byte address 0x4 - core index']
  #allocation1 [shape = 'u32[144,128]{1,0:T(1,128)}', space=vmem, size = 0x12000, scoped, tag = 'internal scratch']
  %s0 = inlined_call_operand.vmem [shape: f32[4,8,32], index: 0, kind: input, shape index: {}]
  %s1 = inlined_call_operand.vmem [shape: f32[32,16], index: 1, kind: input, shape index: {}]
  %s2 = inlined_call_operand.vmem [shape: f32[1,16], index: 2, kind: input, shape index: {}]
  %s3 = inlined_call_operand.vmem [shape: f32[1,16], index: 3, kind: input, shape index: {}]
  %s4 = inlined_call_operand.hbm [shape: f32[4], index: 4, kind: output, shape index: {}]
  %s5 = sld [smem:[#allocation0]]
  $region49: #{tpu_custom_call.1} parent=0
    _
  %s7 = ssub.s32 1, %s5
  %s8 = scalar_select 0, %s7, %s5
  $region1: #{tpu_custom_call.1} parent=0
    #allocation2 [shape = 'u8[512]{0}', space=smem, size = 0x200, scoped, tag = 'output window, operand 0, single buffered']
    #allocation3 [shape = 's32[2]{0}', space=sflag, size = 0x8, scoped, tag = 'scoped memory for tpu_custom_call.1']
    %9 = vsyncpa [#allocation3], 0
    loop: start=0, step=1, limit=6
    $region2: #{tpu_custom_call.1} parent=1 // loop_pre_header
      _
    $region3: #{tpu_custom_call.1} parent=1 // loop_header
      %s11 = sphi 0, %s15
      %p12 = scmp.ge.s32.totalorder %s11, 6
      %s18 = sphi 0, %s30
      %s19 = sphi 0, %s26
      %s20 = sphi 0, %s18
      %s21 = sphi 0, %s19
      %s22 = sphi 0, %s20
      %s23 = sphi 0, %s21
      %s35 = sphi 0, %s37
      %s38 = sphi 0, %s35
      %s39 = sphi 0, %s38
      %s55 = sphi 0, %s39
      %s59 = sphi 0, %s59
      %s61 = sphi 0, %s59
      %s62 = sphi 0, %s61
      %s76 = sphi 0, %s62
      %s80 = sphi 0, %s80
      %s82 = sphi 0, %s80
      %s83 = sphi 0, %s82
      %s97 = sphi 0, %s83
      %s101 = sphi 0, %s101
      %s103 = sphi 0, %s101
      %s104 = sphi 0, %s103
      %s118 = sphi 0, %s104
      %s122 = sphi 0, %s122
      %s124 = sphi 0, %s122
      %s125 = sphi 0, %s124
      %s139 = sphi 0, %s125
    $region4: #{tpu_custom_call.1} parent=1 // loop_header_branch
      %14 = sbr.rel (%p12) target = $region8
    $region5: #{tpu_custom_call.1} parent=1 // loop_body
      %s16 = ssub.s32 %s11, 1
      %s17 = ssub.s32 %s11, 2
      %s24 = sadd.s32 1, %s19
      %p25 = scmp.ge.s32.totalorder %s24, 1
      %s26 = scalar_select %p25, 0, %s24
      %s27 = sadd.s32 1, %s18
      %s28 = scalar_select %p25, %s27, %s18
      %p29 = scmp.ge.s32.totalorder %s28, 4
      %s30 = scalar_select %p29, 0, %s28
      %s31 = ssub.s32 %s18, %s30
      %s32 = ssub.s32 %s19, %s26
      %s33 = sor.u32 %s31, %s32
      %p34 = scmp.eq.s32.totalorder %s33, 0
      %s36 = sadd.s32 %s35, 1
      %s37 = scalar_select %p34, %s35, %s36
      %p40 = pneg %p34
      %p41 = scmp.eq.s32.totalorder %s11, 3
      %p42 = por %p40, %p41
      %p43 = scmp.ne.s32.totalorder %s35, %s38
      %p44 = scmp.eq.s32.totalorder %s11, 0
      %p45 = por %p43, %p44
      %p46 = scmp.ne.s32.totalorder %s35, %s38
      %p47 = scmp.eq.s32.totalorder %s16, 3
      %p48 = por %p46, %p47
      %p49 = scmp.ne.s32.totalorder %s38, %s39
      %p50 = scmp.eq.s32.totalorder %s16, 0
      %p51 = por %p49, %p50
      %p52 = scmp.ne.s32.totalorder %s38, %s39
      %p53 = scmp.eq.s32.totalorder %s17, 3
      %p54 = por %p52, %p53
      %p56 = scmp.ne.s32.totalorder %s39, %s55
      %p57 = scmp.eq.s32.totalorder %s17, 0
      %p58 = por %p56, %p57
      %s60 = sadd.s32 %s59, 1
      %p63 = scmp.eq.s32.totalorder %s11, 3
      %p64 = scmp.ne.s32.totalorder %s59, %s61
      %p65 = scmp.eq.s32.totalorder %s11, 0
      %p66 = por %p64, %p65
      %p67 = scmp.ne.s32.totalorder %s59, %s61
      %p68 = scmp.eq.s32.totalorder %s16, 3
      %p69 = por %p67, %p68
      %p70 = scmp.ne.s32.totalorder %s61, %s62
      %p71 = scmp.eq.s32.totalorder %s16, 0
      %p72 = por %p70, %p71
      %p73 = scmp.ne.s32.totalorder %s61, %s62
      %p74 = scmp.eq.s32.totalorder %s17, 3
      %p75 = por %p73, %p74
      %p77 = scmp.ne.s32.totalorder %s62, %s76
      %p78 = scmp.eq.s32.totalorder %s17, 0
      %p79 = por %p77, %p78
      %s81 = sadd.s32 %s80, 1
      %p84 = scmp.eq.s32.totalorder %s11, 3
      %p85 = scmp.ne.s32.totalorder %s80, %s82
      %p86 = scmp.eq.s32.totalorder %s11, 0
      %p87 = por %p85, %p86
      %p88 = scmp.ne.s32.totalorder %s80, %s82
      %p89 = scmp.eq.s32.totalorder %s16, 3
      %p90 = por %p88, %p89
      %p91 = scmp.ne.s32.totalorder %s82, %s83
      %p92 = scmp.eq.s32.totalorder %s16, 0
      %p93 = por %p91, %p92
      %p94 = scmp.ne.s32.totalorder %s82, %s83
      %p95 = scmp.eq.s32.totalorder %s17, 3
      %p96 = por %p94, %p95
      %p98 = scmp.ne.s32.totalorder %s83, %s97
      %p99 = scmp.eq.s32.totalorder %s17, 0
      %p100 = por %p98, %p99
      %s102 = sadd.s32 %s101, 1
      %p105 = scmp.eq.s32.totalorder %s11, 3
      %p106 = scmp.ne.s32.totalorder %s101, %s103
      %p107 = scmp.eq.s32.totalorder %s11, 0
      %p108 = por %p106, %p107
      %p109 = scmp.ne.s32.totalorder %s101, %s103
      %p110 = scmp.eq.s32.totalorder %s16, 3
      %p111 = por %p109, %p110
      %p112 = scmp.ne.s32.totalorder %s103, %s104
      %p113 = scmp.eq.s32.totalorder %s16, 0
      %p114 = por %p112, %p113
      %p115 = scmp.ne.s32.totalorder %s103, %s104
      %p116 = scmp.eq.s32.totalorder %s17, 3
      %p117 = por %p115, %p116
      %p119 = scmp.ne.s32.totalorder %s104, %s118
      %p120 = scmp.eq.s32.totalorder %s17, 0
      %p121 = por %p119, %p120
      %s123 = sadd.s32 %s122, 1
      %p126 = scmp.eq.s32.totalorder %s11, 3
      %p127 = scmp.ne.s32.totalorder %s122, %s124
      %p128 = scmp.eq.s32.totalorder %s11, 0
      %p129 = por %p127, %p128
      %p130 = scmp.ne.s32.totalorder %s122, %s124
      %p131 = scmp.eq.s32.totalorder %s16, 3
      %p132 = por %p130, %p131
      %p133 = scmp.ne.s32.totalorder %s124, %s125
      %p134 = scmp.eq.s32.totalorder %s16, 0
      %p135 = por %p133, %p134
      %p136 = scmp.ne.s32.totalorder %s124, %s125
      %p137 = scmp.eq.s32.totalorder %s17, 3
      %p138 = por %p136, %p137
      %p140 = scmp.ne.s32.totalorder %s125, %s139
      %p141 = scmp.eq.s32.totalorder %s17, 0
      %p142 = por %p140, %p141
      %p143 = scmp.le.s32.totalorder 1, %s11
      %p144 = scmp.lt.s32.totalorder %s11, 5
      %p145 = pnand %p143, %p144
      %p146 = pneg %p145
      // Predicated region
      $region9: #{tpu_custom_call.1} parent=5 // pred_check
        _
      $region10: #{tpu_custom_call.1} parent=5 // pred_check_branch
        %148 = sbr.rel (%p145) target = $region12
      $region11: #{tpu_custom_call.1} parent=5 // pred_region
        %s149 = ssub.s32 %s11, 1
        // Predicated region
        $region13: #{tpu_custom_call.1} parent=11 // pred_check
          %p150 = pneg %p72
        $region14: #{tpu_custom_call.1} parent=11 // pred_check_branch
          %152 = sbr.rel (%p150) target = $region16
        $region15: #{tpu_custom_call.1} parent=11 // pred_region
          _
        $region16: #{tpu_custom_call.1} parent=11 // pred_fallthru
          _
        // Predicated region
        $region17: #{tpu_custom_call.1} parent=11 // pred_check
          %p153 = pneg %p93
        $region18: #{tpu_custom_call.1} parent=11 // pred_check_branch
          %155 = sbr.rel (%p153) target = $region20
        $region19: #{tpu_custom_call.1} parent=11 // pred_region
          _
        $region20: #{tpu_custom_call.1} parent=11 // pred_fallthru
          _
        // Predicated region
        $region21: #{tpu_custom_call.1} parent=11 // pred_check
          %p156 = pneg %p114
        $region22: #{tpu_custom_call.1} parent=11 // pred_check_branch
          %158 = sbr.rel (%p156) target = $region24
        $region23: #{tpu_custom_call.1} parent=11 // pred_region
          _
        $region24: #{tpu_custom_call.1} parent=11 // pred_fallthru
          _
      $region12: #{tpu_custom_call.1} parent=5 // pred_fallthru
        _
      %p159 = scmp.lt.s32.totalorder %s11, 4
      // Predicated region
      $region25: #{tpu_custom_call.1} parent=5 // pred_check
        %p160 = pneg %p159
      $region26: #{tpu_custom_call.1} parent=5 // pred_check_branch
        %162 = sbr.rel (%p160) target = $region28
      $region27: #{tpu_custom_call.1} parent=5 // pred_region
        // Predicated region
        $region29: #{tpu_custom_call.1} parent=27 // pred_check
          %p163 = pneg %p45
        $region30: #{tpu_custom_call.1} parent=27 // pred_check_branch
          %165 = sbr.rel (%p163) target = $region32
        $region31: #{tpu_custom_call.1} parent=27 // pred_region
          %p166 = scmp.lt.s32.totalorder %s18, 3
          %s167 = scalar_select %p166, %s18, 3
          %p168 = scmp.lt.s32.totalorder %s19, 0
          %s169 = scalar_select %p168, %s19, 0
          %s170 = sadd.s32 %s169, %s167
          %s171 = smul.addr %s170, 8
          %s172 = scalar_lea.vmem %s0, %s171
        $region32: #{tpu_custom_call.1} parent=27 // pred_fallthru
          _
      $region28: #{tpu_custom_call.1} parent=5 // pred_fallthru
        _
      %p173 = scmp.le.s32.totalorder 1, %s11
      %p174 = scmp.lt.s32.totalorder %s11, 5
      %p175 = pnand %p173, %p174
      %p176 = pneg %p175
      // Predicated region
      $region33: #{tpu_custom_call.1} parent=5 // pred_check
        _
      $region34: #{tpu_custom_call.1} parent=5 // pred_check_branch
        %178 = sbr.rel (%p175) target = $region36
      $region35: #{tpu_custom_call.1} parent=5 // pred_region
        %s179 = ssub.s32 %s11, 1
        %p180 = scmp.lt.s32.totalorder %s20, 3
        %s181 = scalar_select %p180, %s20, 3
        %p182 = scmp.lt.s32.totalorder %s21, 0
        %s183 = scalar_select %p182, %s21, 0
        %s184 = sadd.s32 %s183, %s181
        %s185 = smul.addr %s184, 8
        %s186 = scalar_lea.vmem %s0, %s185
        %p187 = pneg %p51
        %p188 = pneg %p48
        %p189 = pneg %p72
        %p190 = pneg %p69
        %p191 = pneg %p93
        %p192 = pneg %p90
        %p193 = pneg %p114
        %p194 = pneg %p111
        %p195 = pneg %p135
        %p196 = pneg %p132
        %p197 = scmp.lt.s32.totalorder %s20, 3
        %s198 = scalar_select %p197, %s20, 3
        %p199 = scmp.lt.s32.totalorder %s21, 0
        %s200 = scalar_select %p199, %s21, 0
        %s201 = sadd.s32 %s200, %s198
        %s202 = smul.addr %s201, 8
        %s203 = scalar_lea.vmem %s0, %s202
        %v204 = vld [vmem:[%s203] sm:$0xff]
        %v205 = vld [vmem:[%s1] sm:$0xff]
        %v206 = vld [vmem:[%s1 + $0x8] sm:$0xff]
        %v207 = vld [vmem:[%s1 + $0x10] sm:$0xff]
        %v208 = vld [vmem:[%s1 + $0x18] sm:$0xff]
        %v209 = vld [vmem:[%s2] sm:$0x1]
        %v211 = vlaneseq
        %v212 = vshrl.u32 %v211, 7
        %v213 = vsub.s32 0, %v212
        %v214 = vrot.slane %v209, %v213
        %vm216 = vcmask 261120
        %v218 = vsel %vm216, %v204, 0
        %220 = vmatprep.subr.mxu0 0.0
        %221 = vmatpush1.msra.mxu0 %v205
        %222 = vmatprep.subr.mxu0 0.0
        %223 = vmatpush1.msra.mxu0 %v206
        %224 = vmatprep.subr.mxu0 0.0
        %225 = vmatpush1.msra.mxu0 %v207
        %226 = vmatprep.subr.mxu0 0.0
        %227 = vmatpush1.msra.mxu0 %v208
        %228 = vmatprep.subr.mxu0 0.0
        %229 = vmatpush1.msra.mxu0 0.0
        %230 = vmatprep.subr.mxu0 0.0
        %231 = vmatpush1.msra.mxu0 0.0
        %232 = vmatprep.subr.mxu0 0.0
        %233 = vmatpush1.msra.mxu0 0.0
        %234 = vmatprep.subr.mxu0 0.0
        %235 = vmatpush1.msra.mxu0 0.0
        %236 = vmatprep.subr.mxu0 0.0
        %237 = vmatpush1.msra.mxu0 0.0
        %238 = vmatprep.subr.mxu0 0.0
        %239 = vmatpush1.msra.mxu0 0.0
        %240 = vmatprep.subr.mxu0 0.0
        %241 = vmatpush1.msra.mxu0 0.0
        %242 = vmatprep.subr.mxu0 0.0
        %243 = vmatpush1.msra.mxu0 0.0
        %244 = vmatprep.subr.mxu0 0.0
        %245 = vmatpush1.msra.mxu0 0.0
        %246 = vmatprep.subr.mxu0 0.0
        %247 = vmatpush1.msra.mxu0 0.0
        %248 = vmatprep.subr.mxu0 0.0
        %249 = vmatpush1.msra.mxu0 0.0
        %250 = vmatprep.subr.mxu0 0.0
        %251 = vmatpush1.msra.mxu0 0.0
        %252 = vmatprep.subr.mxu0 0.0
        %253 = vmatpush1.msra.mxu0 0.0
        %254 = vmatprep.subr.mxu0 0.0
        %255 = vmatpush1.msra.mxu0 0.0
        %256 = vmatprep.subr.mxu0 0.0
        %257 = vmatpush1.msra.mxu0 0.0
        %258 = vmatprep.subr.mxu0 0.0
        %259 = vmatpush1.msra.mxu0 0.0
        %260 = vmatprep.subr.mxu0 0.0
        %261 = vmatpush1.msra.mxu0 0.0
        %262 = vmatprep.subr.mxu0 0.0
        %263 = vmatpush1.msra.mxu0 0.0
        %264 = vmatprep.subr.mxu0 0.0
        %265 = vmatpush1.msra.mxu0 0.0
        %266 = vmatprep.subr.mxu0 0.0
        %267 = vmatpush1.msra.mxu0 0.0
        %268 = vmatprep.subr.mxu0 0.0
        %269 = vmatpush1.msra.mxu0 0.0
        %270 = vmatprep.subr.mxu0 0.0
        %271 = vmatpush1.msra.mxu0 0.0
        %272 = vmatprep.subr.mxu0 0.0
        %273 = vmatpush1.msra.mxu0 0.0
        %274 = vmatprep.subr.mxu0 0.0
        %275 = vmatpush1.msra.mxu0 0.0
        %276 = vmatprep.subr.mxu0 0.0
        %277 = vmatpush1.msra.mxu0 0.0
        %278 = vmatprep.subr.mxu0 0.0
        %279 = vmatpush1.msra.mxu0 0.0
        %280 = vmatprep.subr.mxu0 0.0
        %281 = vmatpush1.msra.mxu0 0.0
        %282 = vmatprep.subr.mxu0 0.0
        %283 = vmatpush1.msra.mxu0 0.0
        %284 = vmatprep.mubr.f32.mxu0 0.0
        %285 = vmatmul.mubr.f32.gmra.mrb[0].mxu0 %v218
        %v286 = vpop.f32.mrb[0].mxu0
        %v287 = vadd.f32 %v214, %v286
        %v288 = vpop.f32.mrb[0].mxu0
        %289 = vdwg.mxu0
        %v290 = vtanh.pop %v287
        %vm291 = vcmask 130048
        %v292 = vsel %vm291, %v290, 0.0
        %v293 = vrot.slane %v292, 4
        %v294 = vadd.f32 %v292, %v293
        %v295 = vrot.slane %v294, 2
        %v296 = vadd.f32 %v294, %v295
        %v297 = vrot.slane %v296, 1
        %v298 = vadd.f32 %v296, %v297
        %v299 = vld [vmem:[%s3] sm:$0x1]
        %v300 = vmul.f32 %v298, %v299
        %vm301 = vcmask 122880
        %v302 = vsel %vm301, %v300, 0.0
        %303 = vadd.xlane.f32.xlu0 %v302
        %v304 = vpop.xlane.xlu0 %303
        %v305 = vrot.slane %v304, 4
        %v306 = vadd.f32 %v304, %v305
        %v307 = vrot.slane %v306, 2
        %v308 = vadd.f32 %v306, %v307
        %v309 = vrot.slane %v308, 1
        %v310 = vadd.f32 %v308, %v309
        %s311 = vtos %v310
        %s312 = sadd.s32 %s20, %s21
        %s313 = scalar_lea.smem [#allocation2], %s312
        %314 = sst [smem:[%s313]] %s311
        // Predicated region
        $region37: #{tpu_custom_call.1} parent=35 // pred_check
          %p315 = pneg %p132
        $region38: #{tpu_custom_call.1} parent=35 // pred_check_branch
          %317 = sbr.rel (%p315) target = $region40
        $region39: #{tpu_custom_call.1} parent=35 // pred_region
          %s319 = ssub.s32 16, 16
          %320 = vsyncadd [#allocation3], %s319
          %323 = dma.smem_to_hbm [#allocation2], 16, %s4, [#allocation3]
        $region40: #{tpu_custom_call.1} parent=35 // pred_fallthru
          _
        // Predicated region
        $region41: #{tpu_custom_call.1} parent=35 // pred_check
          %p324 = pneg %p132
        $region42: #{tpu_custom_call.1} parent=35 // pred_check_branch
          %326 = sbr.rel (%p324) target = $region44
        $region43: #{tpu_custom_call.1} parent=35 // pred_region
          %327 = dma.done [#allocation3], 16
        $region44: #{tpu_custom_call.1} parent=35 // pred_fallthru
          _
        %328 = sfence
      $region36: #{tpu_custom_call.1} parent=5 // pred_fallthru
        _
      %p329 = scmp.le.s32.totalorder 2, %s11
      // Predicated region
      $region45: #{tpu_custom_call.1} parent=5 // pred_check
        %p330 = pneg %p329
      $region46: #{tpu_custom_call.1} parent=5 // pred_check_branch
        %332 = sbr.rel (%p330) target = $region48
      $region47: #{tpu_custom_call.1} parent=5 // pred_region
        %s333 = ssub.s32 %s11, 2
      $region48: #{tpu_custom_call.1} parent=5 // pred_fallthru
        _
    $region6: #{tpu_custom_call.1} parent=1 // loop_footer
      %s15 = sadd.s32 1, %s11
    $region7: #{tpu_custom_call.1} parent=1 // loop_footer_branch
      %10 = sbr.rel target = $region3
    $region8: #{tpu_custom_call.1} parent=1 // loop_exit
      _
    %334 = vsyncpa [#allocation3], 1
    %s335 = scalar_lea.sflag [#allocation3], 1
    %336 = vsyncpa %s335, 1

</llo_original>
